<compile_context>
chip_gen: v7x
topology: tpu7x:2x2x1
jax: 0.10.0
libtpu: 0.0.40
codegen_flags: <defaults>
</compile_context>

<pallas_src>
import jax
import jax.numpy as jnp
from jax.experimental import pallas as pl
from jax.experimental.pallas import tpu as pltpu

LANE = 128


def basic_block_kernel(x_ref, w1_ref, b1_ref, w2_ref, b2_ref, o_ref):
    x = x_ref[...]                                              # (TB, d_in)
    # hidden1: Linear + ReLU (MXU, f32 accumulation)
    h = jnp.dot(x, w1_ref[...], preferred_element_type=jnp.float32)
    h = jnp.maximum(h + b1_ref[...].astype(jnp.float32), 0.0)   # (TB, d_hid) f32
    # hidden2: Linear (feed MXU in the weight dtype)
    y = jnp.dot(h.astype(w2_ref.dtype), w2_ref[...],
                preferred_element_type=jnp.float32)
    # bias + residual + ReLU in f32, single cast on store
    y = jnp.maximum(y + b2_ref[...].astype(jnp.float32) + x.astype(jnp.float32), 0.0)
    o_ref[...] = y.astype(o_ref.dtype)


def pack_factor(n_input):
    """Rows packed per 128-lane row (1 = no packing)."""
    if n_input < LANE and LANE % n_input == 0:
        return LANE // n_input
    return 1


def prepare_params(w1, b1, w2, b2, *, pack=1, dtype=None):
    """One-time conversion from PyTorch Linear layout to kernel layout.

    PyTorch: w (out_features, in_features), b (out_features,).
    Kernel:  w (in, out); if pack > 1, block-diagonal replicated `pack` times
    and biases tiled `pack` times. Biases stay f32.
    """
    w1_t, w2_t = w1.T, w2.T
    if dtype is not None:
        w1_t, w2_t = w1_t.astype(dtype), w2_t.astype(dtype)
    b1_r = b1.astype(jnp.float32).reshape(1, -1)
    b2_r = b2.astype(jnp.float32).reshape(1, -1)
    if pack == 1:
        return w1_t, b1_r, w2_t, b2_r
    eye1 = jnp.eye(pack, dtype=w1_t.dtype)
    w1_bd = jnp.kron(eye1, w1_t)                 # (P*n_in, P*n_hid) block-diag
    w2_bd = jnp.kron(eye1, w2_t)                 # (P*n_hid, P*n_in) block-diag
    b1_bd = jnp.tile(b1_r, (1, pack))
    b2_bd = jnp.tile(b2_r, (1, pack))
    return w1_bd, b1_bd, w2_bd, b2_bd


def _choose_batch_tile(rows, target):
    """Tile over packed batch rows: big (target ~2 MiB/step HBM traffic) but
    with >= 2 grid steps whenever rows allow (v7x megacore / pipelining)."""
    if rows <= 8:
        return rows
    half = pl.cdiv(rows, 2)
    half = pl.cdiv(half, 8) * 8                  # multiple of 8 sublanes
    return int(min(target, half))


def basic_block(x, w1_t, b1_2d, w2_t, b2_2d, *, target_block_rows=2048):
    """x: (B, n_input); params in kernel layout (see prepare_params)."""
    B, n_input = x.shape
    pack = w1_t.shape[0] // n_input
    assert w1_t.shape[0] == pack * n_input, "weight layout inconsistent with x"

    # Pad batch to a multiple of pack; padded rows are discarded after the call.
    B_pad = pl.cdiv(B, pack) * pack
    xp = x if B_pad == B else jnp.pad(x, ((0, B_pad - B), (0, 0)))
    rows = B_pad // pack
    d_in = pack * n_input                        # = 128 when packed
    d_hid = w1_t.shape[1]
    n_hidden = d_hid // pack

    x2 = xp.reshape(rows, d_in)                  # lane-dense packed view

    TB = _choose_batch_tile(rows, target_block_rows)
    grid = (pl.cdiv(rows, TB),)

    # Weights/biases: same block index every step -> DMA'd once, VMEM-resident.
    resident = lambda shape: pl.BlockSpec(shape, lambda i: (0, 0))

    flops = 4 * B_pad * n_input * n_hidden
    bytes_accessed = (2 * rows * d_in + w1_t.size + w2_t.size) * x.dtype.itemsize \
                     + (b1_2d.size + b2_2d.size) * 4

    out2 = pl.pallas_call(
        basic_block_kernel,
        out_shape=jax.ShapeDtypeStruct((rows, d_in), x.dtype),
        grid=grid,
        in_specs=[
            pl.BlockSpec((TB, d_in), lambda i: (i, 0)),   # x: streamed tiles
            resident(w1_t.shape),                          # W1 (block-diag)
            resident(b1_2d.shape),                         # b1 (tiled)
            resident(w2_t.shape),                          # W2 (block-diag)
            resident(b2_2d.shape),                         # b2 (tiled)
        ],
        out_specs=pl.BlockSpec((TB, d_in), lambda i: (i, 0)),
        compiler_params=pltpu.CompilerParams(
            dimension_semantics=("parallel",),             # megacore on v7x
            vmem_limit_bytes=48 * 1024 * 1024,
        ),
        cost_estimate=pl.CostEstimate(
            flops=flops, transcendentals=0, bytes_accessed=bytes_accessed),
    )(x2, w1_t, b1_2d, w2_t, b2_2d)

    out = out2.reshape(B_pad, n_input)
    return out if B_pad == B else out[:B]


if __name__ == "__main__":
    # Small shapes consistent with the module.
    B, n_input, n_hidden = 8, 32, 64

    key = jax.random.PRNGKey(0)
    kx, kw1, kb1, kw2, kb2 = jax.random.split(key, 5)

    x = jax.random.normal(kx, (B, n_input), dtype=jnp.float32)
    # PyTorch Linear shapes: weight (out, in), bias (out,)
    w1 = jax.random.normal(kw1, (n_hidden, n_input), dtype=jnp.float32) * 0.1
    b1 = jax.random.normal(kb1, (n_hidden,), dtype=jnp.float32) * 0.1
    w2 = jax.random.normal(kw2, (n_input, n_hidden), dtype=jnp.float32) * 0.1
    b2 = jax.random.normal(kb2, (n_input,), dtype=jnp.float32) * 0.1

    def ref_fn(xv):
        return jnp.maximum(jnp.maximum(xv @ w1.T + b1, 0.0) @ w2.T + b2 + xv, 0.0)

    P = pack_factor(n_input)                     # 4 -> lane-dense (., 128) tiles
    params_f32 = prepare_params(w1, b1, w2, b2, pack=P)

    # 1) Small batch: single packed tile.
    out = basic_block(x, *params_f32)
    jax.block_until_ready(out)
    assert out.shape == (B, n_input)
    assert jnp.allclose(out, ref_fn(x), atol=1e-5, rtol=1e-5)

    # 2) Larger batch: multi-step batch grid with VMEM-resident weights.
    B_big = 4096
    x_big = jax.random.normal(jax.random.PRNGKey(1), (B_big, n_input), jnp.float32)
    out_big = basic_block(x_big, *params_f32)
    jax.block_until_ready(out_big)
    assert out_big.shape == (B_big, n_input)
    assert jnp.allclose(out_big, ref_fn(x_big), atol=1e-5, rtol=1e-5)

    # 3) Ragged batch (B % pack != 0): zero-pad + slice path.
    x_rag = jax.random.normal(jax.random.PRNGKey(2), (B + 3, n_input), jnp.float32)
    out_rag = basic_block(x_rag, *params_f32)
    jax.block_until_ready(out_rag)
    assert out_rag.shape == (B + 3, n_input)
    assert jnp.allclose(out_rag, ref_fn(x_rag), atol=1e-5, rtol=1e-5)

    # 4) bf16 streaming path (halves HBM bytes; f32 accumulation kept).
    params_bf16 = prepare_params(w1, b1, w2, b2, pack=P, dtype=jnp.bfloat16)
    out_bf = basic_block(x.astype(jnp.bfloat16), *params_bf16)
    jax.block_until_ready(out_bf)
    assert out_bf.dtype == jnp.bfloat16
    assert jnp.allclose(out_bf.astype(jnp.float32), ref_fn(x), atol=1e-1, rtol=5e-2)

    print("KERNEL_OK")
</pallas_src>

<mosaic_0001>
module attributes {stable_mosaic.version = 11 : i64} {
  func.func @basic_block_kernel(%arg0: i32, %arg1: memref<2x128xf32, #tpu.memory_space<vmem>>, %arg2: memref<128x256xf32, #tpu.memory_space<vmem>>, %arg3: memref<1x256xf32, #tpu.memory_space<vmem>>, %arg4: memref<256x128xf32, #tpu.memory_space<vmem>>, %arg5: memref<1x128xf32, #tpu.memory_space<vmem>>, %arg6: memref<2x128xf32, #tpu.memory_space<vmem>>) attributes {dimension_semantics = [#tpu.dimension_semantics<parallel>], iteration_bounds = array<i64: 1>, scalar_prefetch = 0 : i64, scratch_operands = 0 : i64, tpu.core_type = #tpu.core_type<tc>, window_params = [{transform_indices = @transform_0, window_bounds = array<i64: 2, 128>}, {pipeline_mode = #tpu.pipeline_mode<synchronous>, transform_indices = @transform_1, window_bounds = array<i64: 128, 256>}, {pipeline_mode = #tpu.pipeline_mode<synchronous>, transform_indices = @transform_2, window_bounds = array<i64: 1, 256>}, {pipeline_mode = #tpu.pipeline_mode<synchronous>, transform_indices = @transform_3, window_bounds = array<i64: 256, 128>}, {pipeline_mode = #tpu.pipeline_mode<synchronous>, transform_indices = @transform_4, window_bounds = array<i64: 1, 128>}, {transform_indices = @transform_5, window_bounds = array<i64: 2, 128>}]} {
    %c0 = arith.constant 0 : index
    %c0_0 = arith.constant 0 : index
    %0 = vector.load %arg1[%c0, %c0_0] : memref<2x128xf32, #tpu.memory_space<vmem>>, vector<2x128xf32>
    %c0_1 = arith.constant 0 : index
    %c0_2 = arith.constant 0 : index
    %1 = vector.load %arg2[%c0_1, %c0_2] : memref<128x256xf32, #tpu.memory_space<vmem>>, vector<128x256xf32>
    %cst = arith.constant dense<0.000000e+00> : vector<2x256xf32>
    %2 = tpu.matmul %0, %1, %cst {dimension_numbers = #tpu.dot_dimension_numbers<[1], [0], [0], [1], [0, 0, 1, 1], [], []>} : vector<2x128xf32>, vector<128x256xf32>, vector<2x256xf32> -> vector<2x256xf32>
    %c0_3 = arith.constant 0 : index
    %c0_4 = arith.constant 0 : index
    %3 = vector.load %arg3[%c0_3, %c0_4] : memref<1x256xf32, #tpu.memory_space<vmem>>, vector<1x256xf32>
    %4 = vector.broadcast %3 : vector<1x256xf32> to vector<2x256xf32>
    %5 = arith.addf %2, %4 : vector<2x256xf32>
    %cst_5 = arith.constant 0.000000e+00 : f32
    %6 = vector.broadcast %cst_5 : f32 to vector<2x256xf32>
    %7 = arith.maximumf %5, %6 : vector<2x256xf32>
    %c0_6 = arith.constant 0 : index
    %c0_7 = arith.constant 0 : index
    %8 = vector.load %arg4[%c0_6, %c0_7] : memref<256x128xf32, #tpu.memory_space<vmem>>, vector<256x128xf32>
    %cst_8 = arith.constant dense<0.000000e+00> : vector<2x128xf32>
    %9 = tpu.matmul %7, %8, %cst_8 {dimension_numbers = #tpu.dot_dimension_numbers<[1], [0], [0], [1], [0, 0, 1, 1], [], []>} : vector<2x256xf32>, vector<256x128xf32>, vector<2x128xf32> -> vector<2x128xf32>
    %c0_9 = arith.constant 0 : index
    %c0_10 = arith.constant 0 : index
    %10 = vector.load %arg5[%c0_9, %c0_10] : memref<1x128xf32, #tpu.memory_space<vmem>>, vector<1x128xf32>
    %11 = vector.broadcast %10 : vector<1x128xf32> to vector<2x128xf32>
    %12 = arith.addf %9, %11 : vector<2x128xf32>
    %13 = arith.addf %12, %0 : vector<2x128xf32>
    %cst_11 = arith.constant 0.000000e+00 : f32
    %14 = vector.broadcast %cst_11 : f32 to vector<2x128xf32>
    %15 = arith.maximumf %13, %14 : vector<2x128xf32>
    %c0_12 = arith.constant 0 : index
    %c0_13 = arith.constant 0 : index
    %16 = vector.load %arg6[%c0_12, %c0_13] : memref<2x128xf32, #tpu.memory_space<vmem>>, vector<2x128xf32>
    tpu.vector_store %arg6[%c0_12, %c0_13], %15 {strides = array<i32>} : memref<2x128xf32, #tpu.memory_space<vmem>>, vector<2x128xf32>,
    return
  }
  func.func @transform_0(%arg0: i32) -> (i32, i32) {
    %c0_i32 = arith.constant 0 : i32
    %c0_i32_0 = arith.constant 0 : i32
    return %arg0, %c0_i32 : i32, i32
  }
  func.func @transform_1(%arg0: i32) -> (i32, i32) {
    %c0_i32 = arith.constant 0 : i32
    %c0_i32_0 = arith.constant 0 : i32
    %c0_i32_1 = arith.constant 0 : i32
    return %c0_i32, %c0_i32_0 : i32, i32
  }
  func.func @transform_2(%arg0: i32) -> (i32, i32) {
    %c0_i32 = arith.constant 0 : i32
    %c0_i32_0 = arith.constant 0 : i32
    %c0_i32_1 = arith.constant 0 : i32
    return %c0_i32, %c0_i32_0 : i32, i32
  }
  func.func @transform_3(%arg0: i32) -> (i32, i32) {
    %c0_i32 = arith.constant 0 : i32
    %c0_i32_0 = arith.constant 0 : i32
    %c0_i32_1 = arith.constant 0 : i32
    return %c0_i32, %c0_i32_0 : i32, i32
  }
  func.func @transform_4(%arg0: i32) -> (i32, i32) {
    %c0_i32 = arith.constant 0 : i32
    %c0_i32_0 = arith.constant 0 : i32
    %c0_i32_1 = arith.constant 0 : i32
    return %c0_i32, %c0_i32_0 : i32, i32
  }
  func.func @transform_5(%arg0: i32) -> (i32, i32) {
    %c0_i32 = arith.constant 0 : i32
    %c0_i32_0 = arith.constant 0 : i32
    return %arg0, %c0_i32 : i32, i32
  }
}

</mosaic_0001>

<llo_original>
// kernel: tpu_custom_call.1
$region0: #{tpu_custom_call.1}
  #allocation0 [shape = 'u32[]', space=smem, size = 0x4, offset = 0x4, fixed_abs, tag = 'smem constant byte address 0x4 - core index']
  #allocation1 [shape = 'u32[144,128]{1,0:T(1,128)}', space=vmem, size = 0x12000, scoped, tag = 'internal scratch']
  %s0 = inlined_call_operand.hbm [shape: f32[2,128], index: 0, kind: input, shape index: {}]
  %s1 = inlined_call_operand.hbm [shape: f32[128,256], index: 1, kind: input, shape index: {}]
  %s2 = inlined_call_operand.vmem [shape: f32[1,256], index: 2, kind: input, shape index: {}]
  %s3 = inlined_call_operand.hbm [shape: f32[256,128], index: 3, kind: input, shape index: {}]
  %s4 = inlined_call_operand.vmem [shape: f32[1,128], index: 4, kind: input, shape index: {}]
  %s5 = inlined_call_operand.hbm [shape: f32[2,128], index: 5, kind: output, shape index: {}]
  %s6 = sld [smem:[#allocation0]]
  $region42: #{tpu_custom_call.1} parent=0
    _
  %s8 = ssub.s32 1, %s6
  %s9 = scalar_select 0, %s8, %s6
  $region1: #{tpu_custom_call.1} parent=0
    #allocation2 [shape = 'u8[1024]{0}', space=vmem, size = 0x400, scoped, tag = 'input window, operand 0, single buffered']
    #allocation3 [shape = 's32[1]{0}', space=sflag, size = 0x4, scoped, tag = 'scoped memory for tpu_custom_call.1']
    #allocation4 [shape = 's32[1]{0}', space=sflag, size = 0x4, scoped, tag = 'scoped memory for tpu_custom_call.1']
    #allocation5 [shape = 'u8[131072]{0}', space=vmem, size = 0x20000, scoped, tag = 'input window, operand 1, single buffered']
    #allocation6 [shape = 's32[1]{0}', space=sflag, size = 0x4, scoped, tag = 'scoped memory for tpu_custom_call.1']
    #allocation7 [shape = 'u8[131072]{0}', space=vmem, size = 0x20000, scoped, tag = 'input window, operand 3, single buffered']
    #allocation8 [shape = 'u8[1024]{0}', space=vmem, size = 0x400, scoped, tag = 'output window, operand 0, single buffered']
    %10 = vsyncpa [#allocation3], 0
    %11 = vsyncpa [#allocation6], 0
    %12 = vsyncpa [#allocation4], 0
    // Predicated region
    $region2: #{tpu_custom_call.1} parent=1 // pred_check
      _
    $region3: #{tpu_custom_call.1} parent=1 // pred_check_branch
      %14 = sbr.rel (0) target = $region5
    $region4: #{tpu_custom_call.1} parent=1 // pred_region
      %s16 = ssub.s32 32, 32
      %17 = vsyncadd [#allocation3], %s16
      %s19 = sshll.u32 [#allocation2], 4
      %s20 = int_to_ptr.vmem [resolvable:$true] %s19
      %22 = dma.hbm_to_vmem [thread:$0]  %s0, 32, %s20, [#allocation3]
    $region5: #{tpu_custom_call.1} parent=1 // pred_fallthru
      _
    // Predicated region
    $region6: #{tpu_custom_call.1} parent=1 // pred_check
      _
    $region7: #{tpu_custom_call.1} parent=1 // pred_check_branch
      %24 = sbr.rel (0) target = $region9
    $region8: #{tpu_custom_call.1} parent=1 // pred_region
      %s26 = ssub.s32 4096, 4096
      %27 = vsyncadd [#allocation6], %s26
      %s28 = sshll.u32 [#allocation5], 4
      %s29 = int_to_ptr.vmem [resolvable:$true] %s28
      %34 = dma.hbm_to_vmem [thread:$0]  %s1, 4096, %s29, [#allocation6], 256, 256, 16
    $region9: #{tpu_custom_call.1} parent=1 // pred_fallthru
      _
    // Predicated region
    $region10: #{tpu_custom_call.1} parent=1 // pred_check
      _
    $region11: #{tpu_custom_call.1} parent=1 // pred_check_branch
      %36 = sbr.rel (0) target = $region13
    $region12: #{tpu_custom_call.1} parent=1 // pred_region
      _
    $region13: #{tpu_custom_call.1} parent=1 // pred_fallthru
      _
    // Predicated region
    $region14: #{tpu_custom_call.1} parent=1 // pred_check
      _
    $region15: #{tpu_custom_call.1} parent=1 // pred_check_branch
      %38 = sbr.rel (0) target = $region17
    $region16: #{tpu_custom_call.1} parent=1 // pred_region
      %s40 = ssub.s32 4096, 4096
      %41 = vsyncadd [#allocation6], %s40
      %s42 = sshll.u32 [#allocation7], 4
      %s43 = int_to_ptr.vmem [resolvable:$true] %s42
      %48 = dma.hbm_to_vmem [thread:$0]  %s3, 4096, %s43, [#allocation6], 128, 128, 8
    $region17: #{tpu_custom_call.1} parent=1 // pred_fallthru
      _
    // Predicated region
    $region18: #{tpu_custom_call.1} parent=1 // pred_check
      _
    $region19: #{tpu_custom_call.1} parent=1 // pred_check_branch
      %50 = sbr.rel (0) target = $region21
    $region20: #{tpu_custom_call.1} parent=1 // pred_region
      _
    $region21: #{tpu_custom_call.1} parent=1 // pred_fallthru
      _
    // Predicated region
    $region22: #{tpu_custom_call.1} parent=1 // pred_check
      _
    $region23: #{tpu_custom_call.1} parent=1 // pred_check_branch
      %52 = sbr.rel (0) target = $region25
    $region24: #{tpu_custom_call.1} parent=1 // pred_region
      %53 = dma.done [#allocation3], 32
    $region25: #{tpu_custom_call.1} parent=1 // pred_fallthru
      _
    // Predicated region
    $region26: #{tpu_custom_call.1} parent=1 // pred_check
      _
    $region27: #{tpu_custom_call.1} parent=1 // pred_check_branch
      %55 = sbr.rel (0) target = $region29
    $region28: #{tpu_custom_call.1} parent=1 // pred_region
      %56 = dma.done [#allocation6], 4096
    $region29: #{tpu_custom_call.1} parent=1 // pred_fallthru
      _
    // Predicated region
    $region30: #{tpu_custom_call.1} parent=1 // pred_check
      _
    $region31: #{tpu_custom_call.1} parent=1 // pred_check_branch
      %58 = sbr.rel (0) target = $region33
    $region32: #{tpu_custom_call.1} parent=1 // pred_region
      %59 = dma.done [#allocation6], 4096
    $region33: #{tpu_custom_call.1} parent=1 // pred_fallthru
      _
    %v60 = vld [vmem:[#allocation2] sm:$0x3]
    %v61 = vld [vmem:[#allocation5] sm:$0xff]
    %v62 = vld [vmem:[#allocation5 + $0x8] sm:$0xff]
    %v63 = vld [vmem:[#allocation5 + $0x10] sm:$0xff]
    %v64 = vld [vmem:[#allocation5 + $0x18] sm:$0xff]
    %v65 = vld [vmem:[#allocation5 + $0x20] sm:$0xff]
    %v66 = vld [vmem:[#allocation5 + $0x28] sm:$0xff]
    %v67 = vld [vmem:[#allocation5 + $0x30] sm:$0xff]
    %v68 = vld [vmem:[#allocation5 + $0x38] sm:$0xff]
    %v69 = vld [vmem:[#allocation5 + $0x40] sm:$0xff]
    %v70 = vld [vmem:[#allocation5 + $0x48] sm:$0xff]
    %v71 = vld [vmem:[#allocation5 + $0x50] sm:$0xff]
    %v72 = vld [vmem:[#allocation5 + $0x58] sm:$0xff]
    %v73 = vld [vmem:[#allocation5 + $0x60] sm:$0xff]
    %v74 = vld [vmem:[#allocation5 + $0x68] sm:$0xff]
    %v75 = vld [vmem:[#allocation5 + $0x70] sm:$0xff]
    %v76 = vld [vmem:[#allocation5 + $0x78] sm:$0xff]
    %v77 = vld [vmem:[#allocation5 + $0x80] sm:$0xff]
    %v78 = vld [vmem:[#allocation5 + $0x88] sm:$0xff]
    %v79 = vld [vmem:[#allocation5 + $0x90] sm:$0xff]
    %v80 = vld [vmem:[#allocation5 + $0x98] sm:$0xff]
    %v81 = vld [vmem:[#allocation5 + $0xa0] sm:$0xff]
    %v82 = vld [vmem:[#allocation5 + $0xa8] sm:$0xff]
    %v83 = vld [vmem:[#allocation5 + $0xb0] sm:$0xff]
    %v84 = vld [vmem:[#allocation5 + $0xb8] sm:$0xff]
    %v85 = vld [vmem:[#allocation5 + $0xc0] sm:$0xff]
    %v86 = vld [vmem:[#allocation5 + $0xc8] sm:$0xff]
    %v87 = vld [vmem:[#allocation5 + $0xd0] sm:$0xff]
    %v88 = vld [vmem:[#allocation5 + $0xd8] sm:$0xff]
    %v89 = vld [vmem:[#allocation5 + $0xe0] sm:$0xff]
    %v90 = vld [vmem:[#allocation5 + $0xe8] sm:$0xff]
    %v91 = vld [vmem:[#allocation5 + $0xf0] sm:$0xff]
    %v92 = vld [vmem:[#allocation5 + $0xf8] sm:$0xff]
    %v93 = vld [vmem:[%s2] sm:$0x3]
    %v95 = vlaneseq
    %v96 = vshrl.u32 %v95, 7
    %v97 = vsub.s32 0, %v96
    %v98 = vrot.slane %v93, %v97
    %v99 = vlaneseq
    %v100 = vshrl.u32 %v99, 7
    %v101 = vsub.s32 1, %v100
    %v102 = vrot.slane %v93, %v101
    %105 = vmatprep.subr.mxu0 %v62
    %106 = vmatpush1.msra.mxu0 %v61
    %107 = vmatprep.subr.mxu0 %v64
    %108 = vmatpush1.msra.mxu0 %v63
    %109 = vmatprep.subr.mxu0 %v66
    %110 = vmatpush1.msra.mxu0 %v65
    %111 = vmatprep.subr.mxu0 %v68
    %112 = vmatpush1.msra.mxu0 %v67
    %113 = vmatprep.subr.mxu0 %v70
    %114 = vmatpush1.msra.mxu0 %v69
    %115 = vmatprep.subr.mxu0 %v72
    %116 = vmatpush1.msra.mxu0 %v71
    %117 = vmatprep.subr.mxu0 %v74
    %118 = vmatpush1.msra.mxu0 %v73
    %119 = vmatprep.subr.mxu0 %v76
    %120 = vmatpush1.msra.mxu0 %v75
    %121 = vmatprep.subr.mxu0 %v78
    %122 = vmatpush1.msra.mxu0 %v77
    %123 = vmatprep.subr.mxu0 %v80
    %124 = vmatpush1.msra.mxu0 %v79
    %125 = vmatprep.subr.mxu0 %v82
    %126 = vmatpush1.msra.mxu0 %v81
    %127 = vmatprep.subr.mxu0 %v84
    %128 = vmatpush1.msra.mxu0 %v83
    %129 = vmatprep.subr.mxu0 %v86
    %130 = vmatpush1.msra.mxu0 %v85
    %131 = vmatprep.subr.mxu0 %v88
    %132 = vmatpush1.msra.mxu0 %v87
    %133 = vmatprep.subr.mxu0 %v90
    %134 = vmatpush1.msra.mxu0 %v89
    %135 = vmatprep.subr.mxu0 %v92
    %136 = vmatpush1.msra.mxu0 %v91
    %137 = vmatprep.subr.mxu0 0.0
    %138 = vmatpush1.msra.mxu0 0.0
    %139 = vmatprep.subr.mxu0 0.0
    %140 = vmatpush1.msra.mxu0 0.0
    %141 = vmatprep.subr.mxu0 0.0
    %142 = vmatpush1.msra.mxu0 0.0
    %143 = vmatprep.subr.mxu0 0.0
    %144 = vmatpush1.msra.mxu0 0.0
    %145 = vmatprep.subr.mxu0 0.0
    %146 = vmatpush1.msra.mxu0 0.0
    %147 = vmatprep.subr.mxu0 0.0
    %148 = vmatpush1.msra.mxu0 0.0
    %149 = vmatprep.subr.mxu0 0.0
    %150 = vmatpush1.msra.mxu0 0.0
    %151 = vmatprep.subr.mxu0 0.0
    %152 = vmatpush1.msra.mxu0 0.0
    %153 = vmatprep.subr.mxu0 0.0
    %154 = vmatpush1.msra.mxu0 0.0
    %155 = vmatprep.subr.mxu0 0.0
    %156 = vmatpush1.msra.mxu0 0.0
    %157 = vmatprep.subr.mxu0 0.0
    %158 = vmatpush1.msra.mxu0 0.0
    %159 = vmatprep.subr.mxu0 0.0
    %160 = vmatpush1.msra.mxu0 0.0
    %161 = vmatprep.subr.mxu0 0.0
    %162 = vmatpush1.msra.mxu0 0.0
    %163 = vmatprep.subr.mxu0 0.0
    %164 = vmatpush1.msra.mxu0 0.0
    %165 = vmatprep.subr.mxu0 0.0
    %166 = vmatpush1.msra.mxu0 0.0
    %167 = vmatprep.subr.mxu0 0.0
    %168 = vmatpush1.msra.mxu0 0.0
    %169 = vmatprep.mubr.f32.mxu0 0.0
    %170 = vmatmul.mubr.f32.gmra.mrb[0].mxu0 %v60
    %v171 = vpop.f32.mrb[0].mxu0
    %v172 = vadd.f32 %v98, %v171
    %v173 = vpop.f32.mrb[0].mxu0
    %v174 = vadd.f32 %v102, %v173
    %175 = vdwg.mxu0
    %v176 = vmax.f32 %v172, 0.0
    %v177 = vmax.f32 %v174, 0.0
    %v178 = vld [vmem:[#allocation7] sm:$0xff]
    %v179 = vld [vmem:[#allocation7 + $0x8] sm:$0xff]
    %v180 = vld [vmem:[#allocation7 + $0x10] sm:$0xff]
    %v181 = vld [vmem:[#allocation7 + $0x18] sm:$0xff]
    %v182 = vld [vmem:[#allocation7 + $0x20] sm:$0xff]
    %v183 = vld [vmem:[#allocation7 + $0x28] sm:$0xff]
    %v184 = vld [vmem:[#allocation7 + $0x30] sm:$0xff]
    %v185 = vld [vmem:[#allocation7 + $0x38] sm:$0xff]
    %v186 = vld [vmem:[#allocation7 + $0x40] sm:$0xff]
    %v187 = vld [vmem:[#allocation7 + $0x48] sm:$0xff]
    %v188 = vld [vmem:[#allocation7 + $0x50] sm:$0xff]
    %v189 = vld [vmem:[#allocation7 + $0x58] sm:$0xff]
    %v190 = vld [vmem:[#allocation7 + $0x60] sm:$0xff]
    %v191 = vld [vmem:[#allocation7 + $0x68] sm:$0xff]
    %v192 = vld [vmem:[#allocation7 + $0x70] sm:$0xff]
    %v193 = vld [vmem:[#allocation7 + $0x78] sm:$0xff]
    %v194 = vld [vmem:[#allocation7 + $0x80] sm:$0xff]
    %v195 = vld [vmem:[#allocation7 + $0x88] sm:$0xff]
    %v196 = vld [vmem:[#allocation7 + $0x90] sm:$0xff]
    %v197 = vld [vmem:[#allocation7 + $0x98] sm:$0xff]
    %v198 = vld [vmem:[#allocation7 + $0xa0] sm:$0xff]
    %v199 = vld [vmem:[#allocation7 + $0xa8] sm:$0xff]
    %v200 = vld [vmem:[#allocation7 + $0xb0] sm:$0xff]
    %v201 = vld [vmem:[#allocation7 + $0xb8] sm:$0xff]
    %v202 = vld [vmem:[#allocation7 + $0xc0] sm:$0xff]
    %v203 = vld [vmem:[#allocation7 + $0xc8] sm:$0xff]
    %v204 = vld [vmem:[#allocation7 + $0xd0] sm:$0xff]
    %v205 = vld [vmem:[#allocation7 + $0xd8] sm:$0xff]
    %v206 = vld [vmem:[#allocation7 + $0xe0] sm:$0xff]
    %v207 = vld [vmem:[#allocation7 + $0xe8] sm:$0xff]
    %v208 = vld [vmem:[#allocation7 + $0xf0] sm:$0xff]
    %v209 = vld [vmem:[#allocation7 + $0xf8] sm:$0xff]
    %v210 = vld [vmem:[%s4] sm:$0x1]
    %v212 = vlaneseq
    %v213 = vshrl.u32 %v212, 7
    %v214 = vsub.s32 0, %v213
    %v215 = vrot.slane %v210, %v214
    %217 = vmatprep.subr.mxu0 0.0
    %218 = vmatpush1.msra.mxu0 %v178
    %219 = vmatprep.subr.mxu0 0.0
    %220 = vmatpush1.msra.mxu0 %v179
    %221 = vmatprep.subr.mxu0 0.0
    %222 = vmatpush1.msra.mxu0 %v180
    %223 = vmatprep.subr.mxu0 0.0
    %224 = vmatpush1.msra.mxu0 %v181
    %225 = vmatprep.subr.mxu0 0.0
    %226 = vmatpush1.msra.mxu0 %v182
    %227 = vmatprep.subr.mxu0 0.0
    %228 = vmatpush1.msra.mxu0 %v183
    %229 = vmatprep.subr.mxu0 0.0
    %230 = vmatpush1.msra.mxu0 %v184
    %231 = vmatprep.subr.mxu0 0.0
    %232 = vmatpush1.msra.mxu0 %v185
    %233 = vmatprep.subr.mxu0 0.0
    %234 = vmatpush1.msra.mxu0 %v186
    %235 = vmatprep.subr.mxu0 0.0
    %236 = vmatpush1.msra.mxu0 %v187
    %237 = vmatprep.subr.mxu0 0.0
    %238 = vmatpush1.msra.mxu0 %v188
    %239 = vmatprep.subr.mxu0 0.0
    %240 = vmatpush1.msra.mxu0 %v189
    %241 = vmatprep.subr.mxu0 0.0
    %242 = vmatpush1.msra.mxu0 %v190
    %243 = vmatprep.subr.mxu0 0.0
    %244 = vmatpush1.msra.mxu0 %v191
    %245 = vmatprep.subr.mxu0 0.0
    %246 = vmatpush1.msra.mxu0 %v192
    %247 = vmatprep.subr.mxu0 0.0
    %248 = vmatpush1.msra.mxu0 %v193
    %249 = vmatprep.subr.mxu0 0.0
    %250 = vmatpush1.msra.mxu0 %v194
    %251 = vmatprep.subr.mxu0 0.0
    %252 = vmatpush1.msra.mxu0 %v195
    %253 = vmatprep.subr.mxu0 0.0
    %254 = vmatpush1.msra.mxu0 %v196
    %255 = vmatprep.subr.mxu0 0.0
    %256 = vmatpush1.msra.mxu0 %v197
    %257 = vmatprep.subr.mxu0 0.0
    %258 = vmatpush1.msra.mxu0 %v198
    %259 = vmatprep.subr.mxu0 0.0
    %260 = vmatpush1.msra.mxu0 %v199
    %261 = vmatprep.subr.mxu0 0.0
    %262 = vmatpush1.msra.mxu0 %v200
    %263 = vmatprep.subr.mxu0 0.0
    %264 = vmatpush1.msra.mxu0 %v201
    %265 = vmatprep.subr.mxu0 0.0
    %266 = vmatpush1.msra.mxu0 %v202
    %267 = vmatprep.subr.mxu0 0.0
    %268 = vmatpush1.msra.mxu0 %v203
    %269 = vmatprep.subr.mxu0 0.0
    %270 = vmatpush1.msra.mxu0 %v204
    %271 = vmatprep.subr.mxu0 0.0
    %272 = vmatpush1.msra.mxu0 %v205
    %273 = vmatprep.subr.mxu0 0.0
    %274 = vmatpush1.msra.mxu0 %v206
    %275 = vmatprep.subr.mxu0 0.0
    %276 = vmatpush1.msra.mxu0 %v207
    %277 = vmatprep.subr.mxu0 0.0
    %278 = vmatpush1.msra.mxu0 %v208
    %279 = vmatprep.subr.mxu0 0.0
    %280 = vmatpush1.msra.mxu0 %v209
    %281 = vmatprep.mubr.f32.mxu0 %v177
    %282 = vmatmul.mubr.f32.gmra.mrb[0].mxu0 %v176
    %v283 = vpop.f32.mrb[0].mxu0
    %v284 = vadd.f32 %v215, %v283
    %v285 = vpop.f32.mrb[0].mxu0
    %286 = vdwg.mxu0
    %v287 = vadd.f32 %v284, %v60
    %v288 = vmax.f32 %v287, 0.0
    %289 = vst [vmem:[#allocation8] sm:$0x3] %v288
    // Predicated region
    $region34: #{tpu_custom_call.1} parent=1 // pred_check
      _
    $region35: #{tpu_custom_call.1} parent=1 // pred_check_branch
      %291 = sbr.rel (0) target = $region37
    $region36: #{tpu_custom_call.1} parent=1 // pred_region
      %s293 = ssub.s32 32, 32
      %294 = vsyncadd [#allocation4], %s293
      %s296 = sshll.u32 [#allocation8], 4
      %s297 = int_to_ptr.vmem [resolvable:$true] %s296
      %299 = dma.vmem_to_hbm [thread:$0]  %s297, 32, %s5, [#allocation4]
    $region37: #{tpu_custom_call.1} parent=1 // pred_fallthru
      _
    // Predicated region
    $region38: #{tpu_custom_call.1} parent=1 // pred_check
      _
    $region39: #{tpu_custom_call.1} parent=1 // pred_check_branch
      %301 = sbr.rel (0) target = $region41
    $region40: #{tpu_custom_call.1} parent=1 // pred_region
      %302 = dma.done [#allocation4], 32
    $region41: #{tpu_custom_call.1} parent=1 // pred_fallthru
      _
    %303 = vsyncpa [#allocation3], 1
    %304 = vsyncpa [#allocation6], 1
    %305 = vsyncpa [#allocation4], 1

</llo_original>
